<compile_context>
chip_gen: v5e
topology: v5e:2x2
jax: 0.10.0
libtpu: 0.0.40
codegen_flags: <defaults>
</compile_context>

<pallas_src>
import functools

import numpy as np
import jax
import jax.numpy as jnp
from jax import lax
from jax.experimental import pallas as pl
from jax.experimental.pallas import tpu as pltpu

EPS = 1e-5
LANE = 128


def _default_vmem_limit():
    try:
        cap = int(pltpu.get_tpu_info().vmem_capacity_bytes)
    except Exception:
        cap = 64 * 1024 * 1024
    return int(min(cap * 3 // 4, 96 * 1024 * 1024))


VMEM_LIMIT = _default_vmem_limit()


def _round_up(x, m):
    return -(-x // m) * m


def _pick_tile_m(m, cap=1024):
    """Largest multiple-of-8 divisor of m that is <= cap (m itself if small).

    Any m that is a multiple of 8 always has such a divisor (8), so the
    whole-array fallback only triggers for m not divisible by 8, where a
    full-extent block is the legal option anyway."""
    if m <= cap:
        return m
    for t in range(cap - cap % 8, 7, -8):
        if m % t == 0:
            return t
    return m


def _tap_masks(hh, ww, dil):
    """(9, H*W, 1) f32 validity masks for the 3x3 (kh, kw) taps."""
    masks = np.zeros((9, hh * ww, 1), np.float32)
    for kh in range(3):
        dr = (kh - 1) * dil
        for kw in range(3):
            dc = (kw - 1) * dil
            m = np.zeros((hh, ww), np.float32)
            r0, r1 = max(0, -dr), min(hh, hh - dr)
            c0, c1 = max(0, -dc), min(ww, ww - dc)
            if r0 < r1 and c0 < c1:
                m[r0:r1, c0:c1] = 1.0
            masks[kh * 3 + kw] = m.reshape(hh * ww, 1)
    return jnp.asarray(masks)


# ------------------------------- kernels -------------------------------------

def _mm_stats_kernel(x_ref, w_ref, y_ref, ps_ref, *, mxu_dtype):
    """Per M-tile: y = x @ w (MXU) + per-tile partial (sum, sumsq)."""
    y = jnp.dot(x_ref[...].astype(mxu_dtype), w_ref[...],
                preferred_element_type=jnp.float32)
    y_ref[...] = y.astype(y_ref.dtype)
    ps_ref[0:1, :] = jnp.sum(y, axis=0, keepdims=True)
    ps_ref[1:2, :] = jnp.sum(y * y, axis=0, keepdims=True)


def _conv3x3_fused_kernel(y1_ref, ss1_ref, w2_ref, mask_ref, y2_ref, ps_ref,
                          *, dil, dd, hh, ww, mxu_dtype):
    """One (n, d) output plane of the dilated 3x3x3 conv.

    Stage-1 BN (+ReLU) is applied on the fly to each input plane loaded from
    the resident per-batch slab; 27 shifted matmuls accumulate in fp32; the
    plane is stored once and per-plane partial BN stats are emitted."""
    d = pl.program_id(1)
    hw = hh * ww
    cmid = w2_ref.shape[-1]

    scale1 = ss1_ref[0:1, :]
    shift1 = ss1_ref[1:2, :]
    masks = [mask_ref[t] for t in range(9)]          # each (H*W, 1) f32

    acc = jnp.zeros((hw, cmid), jnp.float32)
    for kd in range(3):
        d_in = d + (kd - 1) * dil
        d_ok = (d_in >= 0) & (d_in < dd)
        d_cl = jnp.clip(d_in, 0, dd - 1)
        plane = y1_ref[d_cl].astype(jnp.float32)      # (H*W, Cmid)
        # Fused stage-1 BN + ReLU; zero the whole plane if it is D-halo.
        h = jnp.maximum(plane * scale1 + shift1, 0.0)
        h = h * jnp.where(d_ok, 1.0, 0.0)
        for kh in range(3):
            dr = (kh - 1) * dil
            for kw in range(3):
                dc = (kw - 1) * dil
                k = dr * ww + dc                      # flattened-index offset
                if dr == 0 and dc == 0:
                    win = h
                else:
                    s = (-k) % hw
                    # Pure sublane-axis rotation (two sublane slices + concat)
                    win = jnp.roll(h, s, axis=0) if s else h
                    win = win * masks[kh * 3 + kw]
                acc += jnp.dot(win.astype(mxu_dtype), w2_ref[kd, kh, kw],
                               preferred_element_type=jnp.float32)

    y2_ref[...] = acc.astype(y2_ref.dtype)
    ps_ref[0:1, :] = jnp.sum(acc, axis=0, keepdims=True)
    ps_ref[1:2, :] = jnp.sum(acc * acc, axis=0, keepdims=True)


def _bn_mm_stats_kernel(y2_ref, ss2_ref, w3_ref, y3_ref, ps_ref, *, mxu_dtype):
    """Fused: stage-2 BN+ReLU in registers (h2 never hits HBM), stage-3
    1x1x1 matmul, per-tile partial stats."""
    h2 = jnp.maximum(y2_ref[...].astype(jnp.float32) * ss2_ref[0:1, :]
                     + ss2_ref[1:2, :], 0.0)
    y3 = jnp.dot(h2.astype(mxu_dtype), w3_ref[...],
                 preferred_element_type=jnp.float32)
    y3_ref[...] = y3.astype(y3_ref.dtype)
    ps_ref[0:1, :] = jnp.sum(y3, axis=0, keepdims=True)
    ps_ref[1:2, :] = jnp.sum(y3 * y3, axis=0, keepdims=True)


def _bn_add_relu_kernel(y3_ref, ss3_ref, res_ref, o_ref):
    out = (y3_ref[...].astype(jnp.float32) * ss3_ref[0:1, :] + ss3_ref[1:2, :]
           + res_ref[...])
    o_ref[...] = jnp.maximum(out, 0.0).astype(o_ref.dtype)


# ------------------------------- wrappers -------------------------------------

def _mm_stats(x2d, w, tile_m, mxu_dtype, out_dtype):
    m, k = x2d.shape
    c = w.shape[1]
    nt = m // tile_m
    return pl.pallas_call(
        functools.partial(_mm_stats_kernel, mxu_dtype=mxu_dtype),
        grid=(nt,),
        in_specs=[pl.BlockSpec((tile_m, k), lambda i: (i, 0)),
                  pl.BlockSpec((k, c), lambda i: (0, 0))],
        out_specs=[pl.BlockSpec((tile_m, c), lambda i: (i, 0)),
                   pl.BlockSpec((None, 2, c), lambda i: (i, 0, 0))],
        out_shape=[jax.ShapeDtypeStruct((m, c), out_dtype),
                   jax.ShapeDtypeStruct((nt, 2, c), jnp.float32)],
        compiler_params=pltpu.CompilerParams(
            dimension_semantics=("parallel",),
            vmem_limit_bytes=VMEM_LIMIT),
    )(x2d, w)


def _conv3x3_fused(y1_4d, ss1, w2, masks, *, dil, n, dd, hh, ww,
                   mxu_dtype, out_dtype):
    cmid = w2.shape[-1]
    hw = hh * ww
    kern = functools.partial(_conv3x3_fused_kernel, dil=dil, dd=dd, hh=hh,
                             ww=ww, mxu_dtype=mxu_dtype)
    return pl.pallas_call(
        kern,
        grid=(n, dd),
        in_specs=[
            # Whole-D slab, index depends only on n -> copy elided across d.
            pl.BlockSpec((None, dd, hw, cmid), lambda ni, di: (ni, 0, 0, 0)),
            pl.BlockSpec((2, cmid), lambda ni, di: (0, 0)),
            # Full 3x3x3 weight, constant index -> resident in VMEM.
            pl.BlockSpec((3, 3, 3, cmid, cmid),
                         lambda ni, di: (0, 0, 0, 0, 0)),
            pl.BlockSpec((9, hw, 1), lambda ni, di: (0, 0, 0)),
        ],
        out_specs=[
            pl.BlockSpec((None, None, hw, cmid), lambda ni, di: (ni, di, 0, 0)),
            pl.BlockSpec((None, None, 2, cmid), lambda ni, di: (ni, di, 0, 0)),
        ],
        out_shape=[
            jax.ShapeDtypeStruct((n, dd, hw, cmid), out_dtype),
            jax.ShapeDtypeStruct((n, dd, 2, cmid), jnp.float32),
        ],
        compiler_params=pltpu.CompilerParams(
            dimension_semantics=("parallel", "parallel"),
            vmem_limit_bytes=VMEM_LIMIT),
    )(y1_4d, ss1, w2, masks)


def _bn_mm_stats(y2, ss2, w3, tile_m, mxu_dtype, out_dtype):
    m, cmid = y2.shape
    cout = w3.shape[1]
    nt = m // tile_m
    return pl.pallas_call(
        functools.partial(_bn_mm_stats_kernel, mxu_dtype=mxu_dtype),
        grid=(nt,),
        in_specs=[pl.BlockSpec((tile_m, cmid), lambda i: (i, 0)),
                  pl.BlockSpec((2, cmid), lambda i: (0, 0)),
                  pl.BlockSpec((cmid, cout), lambda i: (0, 0))],
        out_specs=[pl.BlockSpec((tile_m, cout), lambda i: (i, 0)),
                   pl.BlockSpec((None, 2, cout), lambda i: (i, 0, 0))],
        out_shape=[jax.ShapeDtypeStruct((m, cout), out_dtype),
                   jax.ShapeDtypeStruct((nt, 2, cout), jnp.float32)],
        compiler_params=pltpu.CompilerParams(
            dimension_semantics=("parallel",),
            vmem_limit_bytes=VMEM_LIMIT),
    )(y2, ss2, w3)


def _bn_add_relu(y3, ss3, res, tile_m):
    m, c = y3.shape
    return pl.pallas_call(
        _bn_add_relu_kernel,
        grid=(m // tile_m,),
        in_specs=[pl.BlockSpec((tile_m, c), lambda i: (i, 0)),
                  pl.BlockSpec((2, c), lambda i: (0, 0)),
                  pl.BlockSpec((tile_m, c), lambda i: (i, 0))],
        out_specs=pl.BlockSpec((tile_m, c), lambda i: (i, 0)),
        out_shape=jax.ShapeDtypeStruct((m, c), jnp.float32),
        compiler_params=pltpu.CompilerParams(
            dimension_semantics=("parallel",),
            vmem_limit_bytes=VMEM_LIMIT),
    )(y3, ss3, res)


# ----------------------------- host-side glue ---------------------------------

def _fold_bn(psum, count, gamma, beta):
    """Reduce per-step partial (sum, sumsq) and fold BN+affine into
    per-channel (scale, shift).  Tiny (2, C) host-side math."""
    c = psum.shape[-1]
    s = jnp.sum(psum.reshape(-1, 2, c), axis=0)
    mean = s[0] / count
    var = jnp.maximum(s[1] / count - mean * mean, 0.0)   # biased (training BN)
    scale = gamma * lax.rsqrt(var + EPS)
    shift = beta - mean * scale
    return jnp.stack([scale, shift], axis=0)             # (2, C)


def init_params(key, in_channels, mid_channels, dilation):
    ks = jax.random.split(key, 9)
    # PyTorch conv weights: (out, in, kd, kh, kw)
    w1_t = 0.1 * jax.random.normal(ks[0], (mid_channels, in_channels, 1, 1, 1), jnp.float32)
    w2_t = 0.1 * jax.random.normal(ks[1], (mid_channels, mid_channels, 3, 3, 3), jnp.float32)
    w3_t = 0.1 * jax.random.normal(ks[2], (in_channels, mid_channels, 1, 1, 1), jnp.float32)
    return {
        "dilation": dilation,
        "w1": jnp.transpose(w1_t[:, :, 0, 0, 0], (1, 0)),        # [Cin, Cmid]
        "w2": jnp.transpose(w2_t, (2, 3, 4, 1, 0)),              # [kd,kh,kw,Ci,Co]
        "w3": jnp.transpose(w3_t[:, :, 0, 0, 0], (1, 0)),        # [Cmid, Cin]
        "g1": 1.0 + 0.1 * jax.random.normal(ks[3], (mid_channels,), jnp.float32),
        "b1": 0.1 * jax.random.normal(ks[4], (mid_channels,), jnp.float32),
        "g2": 1.0 + 0.1 * jax.random.normal(ks[5], (mid_channels,), jnp.float32),
        "b2": 0.1 * jax.random.normal(ks[6], (mid_channels,), jnp.float32),
        "g3": 1.0 + 0.1 * jax.random.normal(ks[7], (in_channels,), jnp.float32),
        "b3": 0.1 * jax.random.normal(ks[8], (in_channels,), jnp.float32),
        # PyTorch-layout weights kept for the pure-JAX reference.
        "_w1_t": w1_t, "_w2_t": w2_t, "_w3_t": w3_t,
    }


def bottleneck_forward(x_ncdhw, params, mxu_dtype=jnp.bfloat16):
    n, cin, dd, hh, ww = x_ncdhw.shape
    dil = int(params["dilation"])
    cmid = params["w1"].shape[1]
    cin_p = _round_up(cin, LANE)
    cmid_p = _round_up(cmid, LANE)
    m = n * dd * hh * ww
    hw = hh * ww
    tile_m = _pick_tile_m(m)
    # bf16 intermediates on the production path; fp32 on the strict path.
    inter_dtype = jnp.float32 if mxu_dtype == jnp.float32 else jnp.bfloat16

    # NCDHW -> channels-last [M, Cin_p] (zero-padded lanes; padded channels
    # stay exactly zero through every stage, so no stats masking is needed).
    x2d = jnp.transpose(x_ncdhw, (0, 2, 3, 4, 1)).reshape(m, cin)
    x2d = jnp.pad(x2d, ((0, 0), (0, cin_p - cin)))

    w1 = jnp.pad(params["w1"],
                 ((0, cin_p - cin), (0, cmid_p - cmid))).astype(mxu_dtype)
    w2 = jnp.pad(params["w2"],
                 ((0, 0), (0, 0), (0, 0),
                  (0, cmid_p - cmid), (0, cmid_p - cmid))).astype(mxu_dtype)
    w3 = jnp.pad(params["w3"],
                 ((0, cmid_p - cmid), (0, cin_p - cin))).astype(mxu_dtype)
    g1 = jnp.pad(params["g1"], (0, cmid_p - cmid))
    b1 = jnp.pad(params["b1"], (0, cmid_p - cmid))
    g2 = jnp.pad(params["g2"], (0, cmid_p - cmid))
    b2 = jnp.pad(params["b2"], (0, cmid_p - cmid))
    g3 = jnp.pad(params["g3"], (0, cin_p - cin))
    b3 = jnp.pad(params["b3"], (0, cin_p - cin))
    masks = _tap_masks(hh, ww, dil)

    # ---- stage 1: 1x1x1 reduce matmul + partial BN stats ----
    y1, ps1 = _mm_stats(x2d, w1, tile_m, mxu_dtype, inter_dtype)
    ss1 = _fold_bn(ps1, float(m), g1, b1)

    # ---- stage 2: BN1+ReLU fused into the dilated 3x3x3 conv + stats ----
    y2, ps2 = _conv3x3_fused(y1.reshape(n, dd, hw, cmid_p), ss1, w2, masks,
                             dil=dil, n=n, dd=dd, hh=hh, ww=ww,
                             mxu_dtype=mxu_dtype, out_dtype=inter_dtype)
    ss2 = _fold_bn(ps2, float(m), g2, b2)

    # ---- stage 3: BN2+ReLU fused with the 1x1x1 expand matmul + stats ----
    y3, ps3 = _bn_mm_stats(y2.reshape(m, cmid_p), ss2, w3, tile_m,
                           mxu_dtype, inter_dtype)
    ss3 = _fold_bn(ps3, float(m), g3, b3)

    # ---- stage 4: BN3 + residual + ReLU (residual read exactly once) ----
    out2d = _bn_add_relu(y3, ss3, x2d, tile_m)
    out = out2d[:, :cin].reshape(n, dd, hh, ww, cin)
    return jnp.transpose(out, (0, 4, 1, 2, 3))


# ------------------------ pure-JAX reference (NCDHW) --------------------------

def _bn_train(y, gamma, beta):
    mean = jnp.mean(y, axis=(0, 2, 3, 4), keepdims=True)
    var = jnp.mean((y - mean) ** 2, axis=(0, 2, 3, 4), keepdims=True)
    return ((y - mean) * lax.rsqrt(var + EPS) * gamma.reshape(1, -1, 1, 1, 1)
            + beta.reshape(1, -1, 1, 1, 1))


def _conv3d_ref(x, w, padding, dilation):
    return lax.conv_general_dilated(
        x, w, window_strides=(1, 1, 1), padding=[(padding, padding)] * 3,
        rhs_dilation=(dilation, dilation, dilation),
        dimension_numbers=("NCDHW", "OIDHW", "NCDHW"),
        preferred_element_type=jnp.float32)


def bottleneck_reference(x, p):
    d = p["dilation"]
    h = jnp.maximum(_bn_train(_conv3d_ref(x, p["_w1_t"], 0, 1),
                              p["g1"], p["b1"]), 0.0)
    h = jnp.maximum(_bn_train(_conv3d_ref(h, p["_w2_t"], d, d),
                              p["g2"], p["b2"]), 0.0)
    h = _bn_train(_conv3d_ref(h, p["_w3_t"], 0, 1), p["g3"], p["b3"])
    return jnp.maximum(h + x, 0.0)


# ---------------------------------- main ---------------------------------------

if __name__ == "__main__":
    N, Cin, Cmid, dilation = 2, 8, 4, 2
    D = H = W = 8

    key = jax.random.PRNGKey(0)
    kx, kp = jax.random.split(key)
    x = jax.random.normal(kx, (N, Cin, D, H, W), jnp.float32)
    params = init_params(kp, Cin, Cmid, dilation)

    ref = jax.block_until_ready(bottleneck_reference(x, params))

    # Strict fp32 path (exact PyTorch fp32 semantics), tight tolerance.
    out_f32 = jax.block_until_ready(
        bottleneck_forward(x, params, mxu_dtype=jnp.float32))
    assert out_f32.shape == (N, Cin, D, H, W)
    err32 = float(jnp.max(jnp.abs(out_f32 - ref)))
    assert jnp.allclose(out_f32, ref, rtol=1e-4, atol=1e-4), err32

    # Production path: bf16 MXU operands + bf16 intermediates, fp32
    # accumulation and BN math.  Looser tolerance covers bf16 rounding.
    out_bf = jax.block_until_ready(
        bottleneck_forward(x, params, mxu_dtype=jnp.bfloat16))
    errbf = float(jnp.max(jnp.abs(out_bf - ref)))
    assert jnp.allclose(out_bf, ref, rtol=5e-2, atol=5e-2), errbf

    print("KERNEL_OK")
</pallas_src>

<mosaic_0001>
module attributes {stable_mosaic.version = 11 : i64} {
  func.func @_mm_stats_kernel(%arg0: i32, %arg1: memref<1024x128xf32, #tpu.memory_space<vmem>>, %arg2: memref<128x128xf32, #tpu.memory_space<vmem>>, %arg3: memref<1024x128xf32, #tpu.memory_space<vmem>>, %arg4: memref<1x2x128xf32, #tpu.memory_space<vmem>>) attributes {dimension_semantics = [#tpu.dimension_semantics<parallel>], iteration_bounds = array<i64: 1>, scalar_prefetch = 0 : i64, scratch_operands = 0 : i64, tpu.core_type = #tpu.core_type<tc>, window_params = [{transform_indices = @transform_0, window_bounds = array<i64: 1024, 128>}, {pipeline_mode = #tpu.pipeline_mode<synchronous>, transform_indices = @transform_1, window_bounds = array<i64: 128, 128>}, {transform_indices = @transform_2, window_bounds = array<i64: 1024, 128>}, {transform_indices = @transform_3, window_bounds = array<i64: 1, 2, 128>}]} {
    %c0 = arith.constant 0 : index
    %c0_0 = arith.constant 0 : index
    %0 = vector.load %arg1[%c0, %c0_0] : memref<1024x128xf32, #tpu.memory_space<vmem>>, vector<1024x128xf32>
    %c0_1 = arith.constant 0 : index
    %c0_2 = arith.constant 0 : index
    %1 = vector.load %arg2[%c0_1, %c0_2] : memref<128x128xf32, #tpu.memory_space<vmem>>, vector<128x128xf32>
    %cst = arith.constant dense<0.000000e+00> : vector<1024x128xf32>
    %2 = tpu.matmul %0, %1, %cst {dimension_numbers = #tpu.dot_dimension_numbers<[1], [0], [0], [1], [0, 0, 1, 1], [], []>} : vector<1024x128xf32>, vector<128x128xf32>, vector<1024x128xf32> -> vector<1024x128xf32>
    %c0_3 = arith.constant 0 : index
    %c0_4 = arith.constant 0 : index
    %3 = vector.load %arg3[%c0_3, %c0_4] : memref<1024x128xf32, #tpu.memory_space<vmem>>, vector<1024x128xf32>
    tpu.vector_store %arg3[%c0_3, %c0_4], %2 {strides = array<i32>} : memref<1024x128xf32, #tpu.memory_space<vmem>>, vector<1024x128xf32>,
    %cst_5 = arith.constant dense<0.000000e+00> : vector<128xf32>
    %4 = vector.multi_reduction <add>, %2, %cst_5 [0] : vector<1024x128xf32> to vector<128xf32>
    %5 = vector.shape_cast %4 : vector<128xf32> to vector<1x128xf32>
    %c0_6 = arith.constant 0 : index
    %c0_7 = arith.constant 0 : index
    %c0_8 = arith.constant 0 : index
    %6 = vector.load %arg4[%c0_6, %c0_7, %c0_8] : memref<1x2x128xf32, #tpu.memory_space<vmem>>, vector<1x1x128xf32>
    %7 = vector.shape_cast %6 : vector<1x1x128xf32> to vector<1x128xf32>
    %8 = vector.shape_cast %5 : vector<1x128xf32> to vector<1x1x128xf32>
    tpu.vector_store %arg4[%c0_6, %c0_7, %c0_8], %8 {strides = array<i32>} : memref<1x2x128xf32, #tpu.memory_space<vmem>>, vector<1x1x128xf32>,
    %9 = arith.mulf %2, %2 : vector<1024x128xf32>
    %cst_9 = arith.constant dense<0.000000e+00> : vector<128xf32>
    %10 = vector.multi_reduction <add>, %9, %cst_9 [0] : vector<1024x128xf32> to vector<128xf32>
    %11 = vector.shape_cast %10 : vector<128xf32> to vector<1x128xf32>
    %c0_10 = arith.constant 0 : index
    %c1 = arith.constant 1 : index
    %c0_11 = arith.constant 0 : index
    %12 = vector.load %arg4[%c0_10, %c1, %c0_11] : memref<1x2x128xf32, #tpu.memory_space<vmem>>, vector<1x1x128xf32>
    %13 = vector.shape_cast %12 : vector<1x1x128xf32> to vector<1x128xf32>
    %14 = vector.shape_cast %11 : vector<1x128xf32> to vector<1x1x128xf32>
    tpu.vector_store %arg4[%c0_10, %c1, %c0_11], %14 {strides = array<i32>} : memref<1x2x128xf32, #tpu.memory_space<vmem>>, vector<1x1x128xf32>,
    return
  }
  func.func @transform_0(%arg0: i32) -> (i32, i32) {
    %c0_i32 = arith.constant 0 : i32
    %c0_i32_0 = arith.constant 0 : i32
    return %arg0, %c0_i32 : i32, i32
  }
  func.func @transform_1(%arg0: i32) -> (i32, i32) {
    %c0_i32 = arith.constant 0 : i32
    %c0_i32_0 = arith.constant 0 : i32
    %c0_i32_1 = arith.constant 0 : i32
    return %c0_i32, %c0_i32_0 : i32, i32
  }
  func.func @transform_2(%arg0: i32) -> (i32, i32) {
    %c0_i32 = arith.constant 0 : i32
    %c0_i32_0 = arith.constant 0 : i32
    return %arg0, %c0_i32 : i32, i32
  }
  func.func @transform_3(%arg0: i32) -> (i32, i32, i32) {
    %c0_i32 = arith.constant 0 : i32
    %c0_i32_0 = arith.constant 0 : i32
    %c0_i32_1 = arith.constant 0 : i32
    return %arg0, %c0_i32, %c0_i32_0 : i32, i32, i32
  }
}

</mosaic_0001>

<llo_original>
// kernel: tpu_custom_call.1
$region0: #{tpu_custom_call.1}
  #allocation0 [shape = 'u32[]', space=smem, size = 0x4, offset = 0x4, fixed_abs, tag = 'smem constant byte address 0x4 - core index']
  #allocation1 [shape = 'u32[72,128]{1,0:T(1,128)}', space=vmem, size = 0x9000, scoped, tag = 'internal scratch']
  %s0 = inlined_call_operand.hbm [shape: f32[1024,128], index: 0, kind: input, shape index: {}]
  %s1 = inlined_call_operand.hbm [shape: f32[128,128], index: 1, kind: input, shape index: {}]
  %s2 = inlined_call_operand.hbm [shape: f32[1024,128], index: 2, kind: output, shape index: {0}]
  %s3 = inlined_call_operand.hbm [shape: f32[1,2,128], index: 3, kind: output, shape index: {1}]
  %4 = xla_tuple %s2, %s3
  %s5 = sld [smem:[#allocation0]]
  $region34: #{tpu_custom_call.1} parent=0
    _
  %s7 = ssub.s32 1, %s5
  %s8 = scalar_select 0, %s7, %s5
  $region1: #{tpu_custom_call.1} parent=0
    #allocation2 [shape = 'u8[524288]{0}', space=vmem, size = 0x80000, scoped, tag = 'input window, operand 0, single buffered']
    #allocation3 [shape = 's32[1]{0}', space=sflag, size = 0x4, scoped, tag = 'scoped memory for tpu_custom_call.1']
    #allocation4 [shape = 's32[1]{0}', space=sflag, size = 0x4, scoped, tag = 'scoped memory for tpu_custom_call.1']
    #allocation5 [shape = 'u8[65536]{0}', space=vmem, size = 0x10000, scoped, tag = 'input window, operand 1, single buffered']
    #allocation6 [shape = 's32[1]{0}', space=sflag, size = 0x4, scoped, tag = 'scoped memory for tpu_custom_call.1']
    #allocation7 [shape = 'u8[524288]{0}', space=vmem, size = 0x80000, scoped, tag = 'output window, operand 0, single buffered']
    #allocation8 [shape = 'u8[1024]{0}', space=vmem, size = 0x400, scoped, tag = 'output window, operand 1, single buffered']
    #allocation9 [shape = 's32[1]{0}', space=sflag, size = 0x4, scoped, tag = 'scoped memory for tpu_custom_call.1']
    %9 = vsyncpa [#allocation3], 0
    %10 = vsyncpa [#allocation6], 0
    %11 = vsyncpa [#allocation4], 0
    %12 = vsyncpa [#allocation9], 0
    // Predicated region
    $region2: #{tpu_custom_call.1} parent=1 // pred_check
      _
    $region3: #{tpu_custom_call.1} parent=1 // pred_check_branch
      %14 = sbr.rel (0) target = $region5
    $region4: #{tpu_custom_call.1} parent=1 // pred_region
      %16 = vsyncadd [#allocation3], 0
      %s17 = sshll.u32 %s0, 4
      %s18 = int_to_ptr.hbm [resolvable:$true] %s17
      %s19 = sshll.u32 [#allocation2], 4
      %s20 = int_to_ptr.vmem [resolvable:$true] %s19
      %25 = dma.hbm_to_vmem [thread:$0]  %s18, 16384, %s20, [#allocation3], 128, 128, 8
    $region5: #{tpu_custom_call.1} parent=1 // pred_fallthru
      _
    // Predicated region
    $region6: #{tpu_custom_call.1} parent=1 // pred_check
      _
    $region7: #{tpu_custom_call.1} parent=1 // pred_check_branch
      %27 = sbr.rel (0) target = $region9
    $region8: #{tpu_custom_call.1} parent=1 // pred_region
      %29 = vsyncadd [#allocation6], 0
      %s30 = sshll.u32 %s1, 4
      %s31 = int_to_ptr.hbm [resolvable:$true] %s30
      %s32 = sshll.u32 [#allocation5], 4
      %s33 = int_to_ptr.vmem [resolvable:$true] %s32
      %38 = dma.hbm_to_vmem [thread:$0]  %s31, 2048, %s33, [#allocation6], 128, 128, 8
    $region9: #{tpu_custom_call.1} parent=1 // pred_fallthru
      _
    // Predicated region
    $region10: #{tpu_custom_call.1} parent=1 // pred_check
      _
    $region11: #{tpu_custom_call.1} parent=1 // pred_check_branch
      %40 = sbr.rel (0) target = $region13
    $region12: #{tpu_custom_call.1} parent=1 // pred_region
      %42 = dma.done [#allocation3], 16384
    $region13: #{tpu_custom_call.1} parent=1 // pred_fallthru
      _
    // Predicated region
    $region14: #{tpu_custom_call.1} parent=1 // pred_check
      _
    $region15: #{tpu_custom_call.1} parent=1 // pred_check_branch
      %44 = sbr.rel (0) target = $region17
    $region16: #{tpu_custom_call.1} parent=1 // pred_region
      %46 = dma.done [#allocation6], 2048
    $region17: #{tpu_custom_call.1} parent=1 // pred_fallthru
      _
    %v47 = vld [vmem:[#allocation2] sm:$0xff]
    %v48 = vld [vmem:[#allocation2 + $0x8] sm:$0xff]
    %v49 = vld [vmem:[#allocation2 + $0x10] sm:$0xff]
    %v50 = vld [vmem:[#allocation2 + $0x18] sm:$0xff]
    %v51 = vld [vmem:[#allocation2 + $0x20] sm:$0xff]
    %v52 = vld [vmem:[#allocation2 + $0x28] sm:$0xff]
    %v53 = vld [vmem:[#allocation2 + $0x30] sm:$0xff]
    %v54 = vld [vmem:[#allocation2 + $0x38] sm:$0xff]
    %v55 = vld [vmem:[#allocation2 + $0x40] sm:$0xff]
    %v56 = vld [vmem:[#allocation2 + $0x48] sm:$0xff]
    %v57 = vld [vmem:[#allocation2 + $0x50] sm:$0xff]
    %v58 = vld [vmem:[#allocation2 + $0x58] sm:$0xff]
    %v59 = vld [vmem:[#allocation2 + $0x60] sm:$0xff]
    %v60 = vld [vmem:[#allocation2 + $0x68] sm:$0xff]
    %v61 = vld [vmem:[#allocation2 + $0x70] sm:$0xff]
    %v62 = vld [vmem:[#allocation2 + $0x78] sm:$0xff]
    %v63 = vld [vmem:[#allocation2 + $0x80] sm:$0xff]
    %v64 = vld [vmem:[#allocation2 + $0x88] sm:$0xff]
    %v65 = vld [vmem:[#allocation2 + $0x90] sm:$0xff]
    %v66 = vld [vmem:[#allocation2 + $0x98] sm:$0xff]
    %v67 = vld [vmem:[#allocation2 + $0xa0] sm:$0xff]
    %v68 = vld [vmem:[#allocation2 + $0xa8] sm:$0xff]
    %v69 = vld [vmem:[#allocation2 + $0xb0] sm:$0xff]
    %v70 = vld [vmem:[#allocation2 + $0xb8] sm:$0xff]
    %v71 = vld [vmem:[#allocation2 + $0xc0] sm:$0xff]
    %v72 = vld [vmem:[#allocation2 + $0xc8] sm:$0xff]
    %v73 = vld [vmem:[#allocation2 + $0xd0] sm:$0xff]
    %v74 = vld [vmem:[#allocation2 + $0xd8] sm:$0xff]
    %v75 = vld [vmem:[#allocation2 + $0xe0] sm:$0xff]
    %v76 = vld [vmem:[#allocation2 + $0xe8] sm:$0xff]
    %v77 = vld [vmem:[#allocation2 + $0xf0] sm:$0xff]
    %v78 = vld [vmem:[#allocation2 + $0xf8] sm:$0xff]
    %v79 = vld [vmem:[#allocation2 + $0x100] sm:$0xff]
    %v80 = vld [vmem:[#allocation2 + $0x108] sm:$0xff]
    %v81 = vld [vmem:[#allocation2 + $0x110] sm:$0xff]
    %v82 = vld [vmem:[#allocation2 + $0x118] sm:$0xff]
    %v83 = vld [vmem:[#allocation2 + $0x120] sm:$0xff]
    %v84 = vld [vmem:[#allocation2 + $0x128] sm:$0xff]
    %v85 = vld [vmem:[#allocation2 + $0x130] sm:$0xff]
    %v86 = vld [vmem:[#allocation2 + $0x138] sm:$0xff]
    %v87 = vld [vmem:[#allocation2 + $0x140] sm:$0xff]
    %v88 = vld [vmem:[#allocation2 + $0x148] sm:$0xff]
    %v89 = vld [vmem:[#allocation2 + $0x150] sm:$0xff]
    %v90 = vld [vmem:[#allocation2 + $0x158] sm:$0xff]
    %v91 = vld [vmem:[#allocation2 + $0x160] sm:$0xff]
    %v92 = vld [vmem:[#allocation2 + $0x168] sm:$0xff]
    %v93 = vld [vmem:[#allocation2 + $0x170] sm:$0xff]
    %v94 = vld [vmem:[#allocation2 + $0x178] sm:$0xff]
    %v95 = vld [vmem:[#allocation2 + $0x180] sm:$0xff]
    %v96 = vld [vmem:[#allocation2 + $0x188] sm:$0xff]
    %v97 = vld [vmem:[#allocation2 + $0x190] sm:$0xff]
    %v98 = vld [vmem:[#allocation2 + $0x198] sm:$0xff]
    %v99 = vld [vmem:[#allocation2 + $0x1a0] sm:$0xff]
    %v100 = vld [vmem:[#allocation2 + $0x1a8] sm:$0xff]
    %v101 = vld [vmem:[#allocation2 + $0x1b0] sm:$0xff]
    %v102 = vld [vmem:[#allocation2 + $0x1b8] sm:$0xff]
    %v103 = vld [vmem:[#allocation2 + $0x1c0] sm:$0xff]
    %v104 = vld [vmem:[#allocation2 + $0x1c8] sm:$0xff]
    %v105 = vld [vmem:[#allocation2 + $0x1d0] sm:$0xff]
    %v106 = vld [vmem:[#allocation2 + $0x1d8] sm:$0xff]
    %v107 = vld [vmem:[#allocation2 + $0x1e0] sm:$0xff]
    %v108 = vld [vmem:[#allocation2 + $0x1e8] sm:$0xff]
    %v109 = vld [vmem:[#allocation2 + $0x1f0] sm:$0xff]
    %v110 = vld [vmem:[#allocation2 + $0x1f8] sm:$0xff]
    %v111 = vld [vmem:[#allocation2 + $0x200] sm:$0xff]
    %v112 = vld [vmem:[#allocation2 + $0x208] sm:$0xff]
    %v113 = vld [vmem:[#allocation2 + $0x210] sm:$0xff]
    %v114 = vld [vmem:[#allocation2 + $0x218] sm:$0xff]
    %v115 = vld [vmem:[#allocation2 + $0x220] sm:$0xff]
    %v116 = vld [vmem:[#allocation2 + $0x228] sm:$0xff]
    %v117 = vld [vmem:[#allocation2 + $0x230] sm:$0xff]
    %v118 = vld [vmem:[#allocation2 + $0x238] sm:$0xff]
    %v119 = vld [vmem:[#allocation2 + $0x240] sm:$0xff]
    %v120 = vld [vmem:[#allocation2 + $0x248] sm:$0xff]
    %v121 = vld [vmem:[#allocation2 + $0x250] sm:$0xff]
    %v122 = vld [vmem:[#allocation2 + $0x258] sm:$0xff]
    %v123 = vld [vmem:[#allocation2 + $0x260] sm:$0xff]
    %v124 = vld [vmem:[#allocation2 + $0x268] sm:$0xff]
    %v125 = vld [vmem:[#allocation2 + $0x270] sm:$0xff]
    %v126 = vld [vmem:[#allocation2 + $0x278] sm:$0xff]
    %v127 = vld [vmem:[#allocation2 + $0x280] sm:$0xff]
    %v128 = vld [vmem:[#allocation2 + $0x288] sm:$0xff]
    %v129 = vld [vmem:[#allocation2 + $0x290] sm:$0xff]
    %v130 = vld [vmem:[#allocation2 + $0x298] sm:$0xff]
    %v131 = vld [vmem:[#allocation2 + $0x2a0] sm:$0xff]
    %v132 = vld [vmem:[#allocation2 + $0x2a8] sm:$0xff]
    %v133 = vld [vmem:[#allocation2 + $0x2b0] sm:$0xff]
    %v134 = vld [vmem:[#allocation2 + $0x2b8] sm:$0xff]
    %v135 = vld [vmem:[#allocation2 + $0x2c0] sm:$0xff]
    %v136 = vld [vmem:[#allocation2 + $0x2c8] sm:$0xff]
    %v137 = vld [vmem:[#allocation2 + $0x2d0] sm:$0xff]
    %v138 = vld [vmem:[#allocation2 + $0x2d8] sm:$0xff]
    %v139 = vld [vmem:[#allocation2 + $0x2e0] sm:$0xff]
    %v140 = vld [vmem:[#allocation2 + $0x2e8] sm:$0xff]
    %v141 = vld [vmem:[#allocation2 + $0x2f0] sm:$0xff]
    %v142 = vld [vmem:[#allocation2 + $0x2f8] sm:$0xff]
    %v143 = vld [vmem:[#allocation2 + $0x300] sm:$0xff]
    %v144 = vld [vmem:[#allocation2 + $0x308] sm:$0xff]
    %v145 = vld [vmem:[#allocation2 + $0x310] sm:$0xff]
    %v146 = vld [vmem:[#allocation2 + $0x318] sm:$0xff]
    %v147 = vld [vmem:[#allocation2 + $0x320] sm:$0xff]
    %v148 = vld [vmem:[#allocation2 + $0x328] sm:$0xff]
    %v149 = vld [vmem:[#allocation2 + $0x330] sm:$0xff]
    %v150 = vld [vmem:[#allocation2 + $0x338] sm:$0xff]
    %v151 = vld [vmem:[#allocation2 + $0x340] sm:$0xff]
    %v152 = vld [vmem:[#allocation2 + $0x348] sm:$0xff]
    %v153 = vld [vmem:[#allocation2 + $0x350] sm:$0xff]
    %v154 = vld [vmem:[#allocation2 + $0x358] sm:$0xff]
    %v155 = vld [vmem:[#allocation2 + $0x360] sm:$0xff]
    %v156 = vld [vmem:[#allocation2 + $0x368] sm:$0xff]
    %v157 = vld [vmem:[#allocation2 + $0x370] sm:$0xff]
    %v158 = vld [vmem:[#allocation2 + $0x378] sm:$0xff]
    %v159 = vld [vmem:[#allocation2 + $0x380] sm:$0xff]
    %v160 = vld [vmem:[#allocation2 + $0x388] sm:$0xff]
    %v161 = vld [vmem:[#allocation2 + $0x390] sm:$0xff]
    %v162 = vld [vmem:[#allocation2 + $0x398] sm:$0xff]
    %v163 = vld [vmem:[#allocation2 + $0x3a0] sm:$0xff]
    %v164 = vld [vmem:[#allocation2 + $0x3a8] sm:$0xff]
    %v165 = vld [vmem:[#allocation2 + $0x3b0] sm:$0xff]
    %v166 = vld [vmem:[#allocation2 + $0x3b8] sm:$0xff]
    %v167 = vld [vmem:[#allocation2 + $0x3c0] sm:$0xff]
    %v168 = vld [vmem:[#allocation2 + $0x3c8] sm:$0xff]
    %v169 = vld [vmem:[#allocation2 + $0x3d0] sm:$0xff]
    %v170 = vld [vmem:[#allocation2 + $0x3d8] sm:$0xff]
    %v171 = vld [vmem:[#allocation2 + $0x3e0] sm:$0xff]
    %v172 = vld [vmem:[#allocation2 + $0x3e8] sm:$0xff]
    %v173 = vld [vmem:[#allocation2 + $0x3f0] sm:$0xff]
    %v174 = vld [vmem:[#allocation2 + $0x3f8] sm:$0xff]
    %v175 = vld [vmem:[#allocation5] sm:$0xff]
    %v176 = vld [vmem:[#allocation5 + $0x8] sm:$0xff]
    %v177 = vld [vmem:[#allocation5 + $0x10] sm:$0xff]
    %v178 = vld [vmem:[#allocation5 + $0x18] sm:$0xff]
    %v179 = vld [vmem:[#allocation5 + $0x20] sm:$0xff]
    %v180 = vld [vmem:[#allocation5 + $0x28] sm:$0xff]
    %v181 = vld [vmem:[#allocation5 + $0x30] sm:$0xff]
    %v182 = vld [vmem:[#allocation5 + $0x38] sm:$0xff]
    %v183 = vld [vmem:[#allocation5 + $0x40] sm:$0xff]
    %v184 = vld [vmem:[#allocation5 + $0x48] sm:$0xff]
    %v185 = vld [vmem:[#allocation5 + $0x50] sm:$0xff]
    %v186 = vld [vmem:[#allocation5 + $0x58] sm:$0xff]
    %v187 = vld [vmem:[#allocation5 + $0x60] sm:$0xff]
    %v188 = vld [vmem:[#allocation5 + $0x68] sm:$0xff]
    %v189 = vld [vmem:[#allocation5 + $0x70] sm:$0xff]
    %v190 = vld [vmem:[#allocation5 + $0x78] sm:$0xff]
    %191 = vmatpush.msra.mxu0 %v190
    %192 = vmatpush.msra.mxu0 %v189
    %193 = vmatpush.msra.mxu0 %v188
    %194 = vmatpush.msra.mxu0 %v187
    %195 = vmatpush.msra.mxu0 %v186
    %196 = vmatpush.msra.mxu0 %v185
    %197 = vmatpush.msra.mxu0 %v184
    %198 = vmatpush.msra.mxu0 %v183
    %199 = vmatpush.msra.mxu0 %v182
    %200 = vmatpush.msra.mxu0 %v181
    %201 = vmatpush.msra.mxu0 %v180
    %202 = vmatpush.msra.mxu0 %v179
    %203 = vmatpush.msra.mxu0 %v178
    %204 = vmatpush.msra.mxu0 %v177
    %205 = vmatpush.msra.mxu0 %v176
    %206 = vmatpush.msra.mxu0 %v175
    %207 = vmatmul.f32.gmra.mxu0 %v47
    %v208 = vpop.f32.mrf.mxu0
    %v209 = vadd.f32 0.0, %v208
    %210 = vmatmul.f32.gmra.mxu0 %v48
    %v211 = vpop.f32.mrf.mxu0
    %v212 = vadd.f32 0.0, %v211
    %213 = vmatmul.f32.gmra.mxu0 %v49
    %v214 = vpop.f32.mrf.mxu0
    %v215 = vadd.f32 0.0, %v214
    %216 = vmatmul.f32.gmra.mxu0 %v50
    %v217 = vpop.f32.mrf.mxu0
    %v218 = vadd.f32 0.0, %v217
    %219 = vmatmul.f32.gmra.mxu0 %v51
    %v220 = vpop.f32.mrf.mxu0
    %v221 = vadd.f32 0.0, %v220
    %222 = vmatmul.f32.gmra.mxu0 %v52
    %v223 = vpop.f32.mrf.mxu0
    %v224 = vadd.f32 0.0, %v223
    %225 = vmatmul.f32.gmra.mxu0 %v53
    %v226 = vpop.f32.mrf.mxu0
    %v227 = vadd.f32 0.0, %v226
    %228 = vmatmul.f32.gmra.mxu0 %v54
    %v229 = vpop.f32.mrf.mxu0
    %v230 = vadd.f32 0.0, %v229
    %231 = vmatmul.f32.gmra.mxu0 %v55
    %v232 = vpop.f32.mrf.mxu0
    %v233 = vadd.f32 0.0, %v232
    %234 = vmatmul.f32.gmra.mxu0 %v56
    %v235 = vpop.f32.mrf.mxu0
    %v236 = vadd.f32 0.0, %v235
    %237 = vmatmul.f32.gmra.mxu0 %v57
    %v238 = vpop.f32.mrf.mxu0
    %v239 = vadd.f32 0.0, %v238
    %240 = vmatmul.f32.gmra.mxu0 %v58
    %v241 = vpop.f32.mrf.mxu0
    %v242 = vadd.f32 0.0, %v241
    %243 = vmatmul.f32.gmra.mxu0 %v59
    %v244 = vpop.f32.mrf.mxu0
    %v245 = vadd.f32 0.0, %v244
    %246 = vmatmul.f32.gmra.mxu0 %v60
    %v247 = vpop.f32.mrf.mxu0
    %v248 = vadd.f32 0.0, %v247
    %249 = vmatmul.f32.gmra.mxu0 %v61
    %v250 = vpop.f32.mrf.mxu0
    %v251 = vadd.f32 0.0, %v250
    %252 = vmatmul.f32.gmra.mxu0 %v62
    %v253 = vpop.f32.mrf.mxu0
    %v254 = vadd.f32 0.0, %v253
    %255 = vmatmul.f32.gmra.mxu0 %v63
    %v256 = vpop.f32.mrf.mxu0
    %v257 = vadd.f32 0.0, %v256
    %258 = vmatmul.f32.gmra.mxu0 %v64
    %v259 = vpop.f32.mrf.mxu0
    %v260 = vadd.f32 0.0, %v259
    %261 = vmatmul.f32.gmra.mxu0 %v65
    %v262 = vpop.f32.mrf.mxu0
    %v263 = vadd.f32 0.0, %v262
    %264 = vmatmul.f32.gmra.mxu0 %v66
    %v265 = vpop.f32.mrf.mxu0
    %v266 = vadd.f32 0.0, %v265
    %267 = vmatmul.f32.gmra.mxu0 %v67
    %v268 = vpop.f32.mrf.mxu0
    %v269 = vadd.f32 0.0, %v268
    %270 = vmatmul.f32.gmra.mxu0 %v68
    %v271 = vpop.f32.mrf.mxu0
    %v272 = vadd.f32 0.0, %v271
    %273 = vmatmul.f32.gmra.mxu0 %v69
    %v274 = vpop.f32.mrf.mxu0
    %v275 = vadd.f32 0.0, %v274
    %276 = vmatmul.f32.gmra.mxu0 %v70
    %v277 = vpop.f32.mrf.mxu0
    %v278 = vadd.f32 0.0, %v277
    %279 = vmatmul.f32.gmra.mxu0 %v71
    %v280 = vpop.f32.mrf.mxu0
    %v281 = vadd.f32 0.0, %v280
    %282 = vmatmul.f32.gmra.mxu0 %v72
    %v283 = vpop.f32.mrf.mxu0
    %v284 = vadd.f32 0.0, %v283
    %285 = vmatmul.f32.gmra.mxu0 %v73
    %v286 = vpop.f32.mrf.mxu0
    %v287 = vadd.f32 0.0, %v286
    %288 = vmatmul.f32.gmra.mxu0 %v74
    %v289 = vpop.f32.mrf.mxu0
    %v290 = vadd.f32 0.0, %v289
    %291 = vmatmul.f32.gmra.mxu0 %v75
    %v292 = vpop.f32.mrf.mxu0
    %v293 = vadd.f32 0.0, %v292
    %294 = vmatmul.f32.gmra.mxu0 %v76
    %v295 = vpop.f32.mrf.mxu0
    %v296 = vadd.f32 0.0, %v295
    %297 = vmatmul.f32.gmra.mxu0 %v77
    %v298 = vpop.f32.mrf.mxu0
    %v299 = vadd.f32 0.0, %v298
    %300 = vmatmul.f32.gmra.mxu0 %v78
    %v301 = vpop.f32.mrf.mxu0
    %v302 = vadd.f32 0.0, %v301
    %303 = vmatmul.f32.gmra.mxu0 %v79
    %v304 = vpop.f32.mrf.mxu0
    %v305 = vadd.f32 0.0, %v304
    %306 = vmatmul.f32.gmra.mxu0 %v80
    %v307 = vpop.f32.mrf.mxu0
    %v308 = vadd.f32 0.0, %v307
    %309 = vmatmul.f32.gmra.mxu0 %v81
    %v310 = vpop.f32.mrf.mxu0
    %v311 = vadd.f32 0.0, %v310
    %312 = vmatmul.f32.gmra.mxu0 %v82
    %v313 = vpop.f32.mrf.mxu0
    %v314 = vadd.f32 0.0, %v313
    %315 = vmatmul.f32.gmra.mxu0 %v83
    %v316 = vpop.f32.mrf.mxu0
    %v317 = vadd.f32 0.0, %v316
    %318 = vmatmul.f32.gmra.mxu0 %v84
    %v319 = vpop.f32.mrf.mxu0
    %v320 = vadd.f32 0.0, %v319
    %321 = vmatmul.f32.gmra.mxu0 %v85
    %v322 = vpop.f32.mrf.mxu0
    %v323 = vadd.f32 0.0, %v322
    %324 = vmatmul.f32.gmra.mxu0 %v86
    %v325 = vpop.f32.mrf.mxu0
    %v326 = vadd.f32 0.0, %v325
    %327 = vmatmul.f32.gmra.mxu0 %v87
    %v328 = vpop.f32.mrf.mxu0
    %v329 = vadd.f32 0.0, %v328
    %330 = vmatmul.f32.gmra.mxu0 %v88
    %v331 = vpop.f32.mrf.mxu0
    %v332 = vadd.f32 0.0, %v331
    %333 = vmatmul.f32.gmra.mxu0 %v89
    %v334 = vpop.f32.mrf.mxu0
    %v335 = vadd.f32 0.0, %v334
    %336 = vmatmul.f32.gmra.mxu0 %v90
    %v337 = vpop.f32.mrf.mxu0
    %v338 = vadd.f32 0.0, %v337
    %339 = vmatmul.f32.gmra.mxu0 %v91
    %v340 = vpop.f32.mrf.mxu0
    %v341 = vadd.f32 0.0, %v340
    %342 = vmatmul.f32.gmra.mxu0 %v92
    %v343 = vpop.f32.mrf.mxu0
    %v344 = vadd.f32 0.0, %v343
    %345 = vmatmul.f32.gmra.mxu0 %v93
    %v346 = vpop.f32.mrf.mxu0
    %v347 = vadd.f32 0.0, %v346
    %348 = vmatmul.f32.gmra.mxu0 %v94
    %v349 = vpop.f32.mrf.mxu0
    %v350 = vadd.f32 0.0, %v349
    %351 = vmatmul.f32.gmra.mxu0 %v95
    %v352 = vpop.f32.mrf.mxu0
    %v353 = vadd.f32 0.0, %v352
    %354 = vmatmul.f32.gmra.mxu0 %v96
    %v355 = vpop.f32.mrf.mxu0
    %v356 = vadd.f32 0.0, %v355
    %357 = vmatmul.f32.gmra.mxu0 %v97
    %v358 = vpop.f32.mrf.mxu0
    %v359 = vadd.f32 0.0, %v358
    %360 = vmatmul.f32.gmra.mxu0 %v98
    %v361 = vpop.f32.mrf.mxu0
    %v362 = vadd.f32 0.0, %v361
    %363 = vmatmul.f32.gmra.mxu0 %v99
    %v364 = vpop.f32.mrf.mxu0
    %v365 = vadd.f32 0.0, %v364
    %366 = vmatmul.f32.gmra.mxu0 %v100
    %v367 = vpop.f32.mrf.mxu0
    %v368 = vadd.f32 0.0, %v367
    %369 = vmatmul.f32.gmra.mxu0 %v101
    %v370 = vpop.f32.mrf.mxu0
    %v371 = vadd.f32 0.0, %v370
    %372 = vmatmul.f32.gmra.mxu0 %v102
    %v373 = vpop.f32.mrf.mxu0
    %v374 = vadd.f32 0.0, %v373
    %375 = vmatmul.f32.gmra.mxu0 %v103
    %v376 = vpop.f32.mrf.mxu0
    %v377 = vadd.f32 0.0, %v376
    %378 = vmatmul.f32.gmra.mxu0 %v104
    %v379 = vpop.f32.mrf.mxu0
    %v380 = vadd.f32 0.0, %v379
    %381 = vmatmul.f32.gmra.mxu0 %v105
    %v382 = vpop.f32.mrf.mxu0
    %v383 = vadd.f32 0.0, %v382
    %384 = vmatmul.f32.gmra.mxu0 %v106
    %v385 = vpop.f32.mrf.mxu0
    %v386 = vadd.f32 0.0, %v385
    %387 = vmatmul.f32.gmra.mxu0 %v107
    %v388 = vpop.f32.mrf.mxu0
    %v389 = vadd.f32 0.0, %v388
    %390 = vmatmul.f32.gmra.mxu0 %v108
    %v391 = vpop.f32.mrf.mxu0
    %v392 = vadd.f32 0.0, %v391
    %393 = vmatmul.f32.gmra.mxu0 %v109
    %v394 = vpop.f32.mrf.mxu0
    %v395 = vadd.f32 0.0, %v394
    %396 = vmatmul.f32.gmra.mxu0 %v110
    %v397 = vpop.f32.mrf.mxu0
    %v398 = vadd.f32 0.0, %v397
    %399 = vmatmul.f32.gmra.mxu0 %v111
    %v400 = vpop.f32.mrf.mxu0
    %v401 = vadd.f32 0.0, %v400
    %402 = vmatmul.f32.gmra.mxu0 %v112
    %v403 = vpop.f32.mrf.mxu0
    %v404 = vadd.f32 0.0, %v403
    %405 = vmatmul.f32.gmra.mxu0 %v113
    %v406 = vpop.f32.mrf.mxu0
    %v407 = vadd.f32 0.0, %v406
    %408 = vmatmul.f32.gmra.mxu0 %v114
    %v409 = vpop.f32.mrf.mxu0
    %v410 = vadd.f32 0.0, %v409
    %411 = vmatmul.f32.gmra.mxu0 %v115
    %v412 = vpop.f32.mrf.mxu0
    %v413 = vadd.f32 0.0, %v412
    %414 = vmatmul.f32.gmra.mxu0 %v116
    %v415 = vpop.f32.mrf.mxu0
    %v416 = vadd.f32 0.0, %v415
    %417 = vmatmul.f32.gmra.mxu0 %v117
    %v418 = vpop.f32.mrf.mxu0
    %v419 = vadd.f32 0.0, %v418
    %420 = vmatmul.f32.gmra.mxu0 %v118
    %v421 = vpop.f32.mrf.mxu0
    %v422 = vadd.f32 0.0, %v421
    %423 = vmatmul.f32.gmra.mxu0 %v119
    %v424 = vpop.f32.mrf.mxu0
    %v425 = vadd.f32 0.0, %v424
    %426 = vmatmul.f32.gmra.mxu0 %v120
    %v427 = vpop.f32.mrf.mxu0
    %v428 = vadd.f32 0.0, %v427
    %429 = vmatmul.f32.gmra.mxu0 %v121
    %v430 = vpop.f32.mrf.mxu0
    %v431 = vadd.f32 0.0, %v430
    %432 = vmatmul.f32.gmra.mxu0 %v122
    %v433 = vpop.f32.mrf.mxu0
    %v434 = vadd.f32 0.0, %v433
    %435 = vmatmul.f32.gmra.mxu0 %v123
    %v436 = vpop.f32.mrf.mxu0
    %v437 = vadd.f32 0.0, %v436
    %438 = vmatmul.f32.gmra.mxu0 %v124
    %v439 = vpop.f32.mrf.mxu0
    %v440 = vadd.f32 0.0, %v439
    %441 = vmatmul.f32.gmra.mxu0 %v125
    %v442 = vpop.f32.mrf.mxu0
    %v443 = vadd.f32 0.0, %v442
    %444 = vmatmul.f32.gmra.mxu0 %v126
    %v445 = vpop.f32.mrf.mxu0
    %v446 = vadd.f32 0.0, %v445
    %447 = vmatmul.f32.gmra.mxu0 %v127
    %v448 = vpop.f32.mrf.mxu0
    %v449 = vadd.f32 0.0, %v448
    %450 = vmatmul.f32.gmra.mxu0 %v128
    %v451 = vpop.f32.mrf.mxu0
    %v452 = vadd.f32 0.0, %v451
    %453 = vmatmul.f32.gmra.mxu0 %v129
    %v454 = vpop.f32.mrf.mxu0
    %v455 = vadd.f32 0.0, %v454
    %456 = vmatmul.f32.gmra.mxu0 %v130
    %v457 = vpop.f32.mrf.mxu0
    %v458 = vadd.f32 0.0, %v457
    %459 = vmatmul.f32.gmra.mxu0 %v131
    %v460 = vpop.f32.mrf.mxu0
    %v461 = vadd.f32 0.0, %v460
    %462 = vmatmul.f32.gmra.mxu0 %v132
    %v463 = vpop.f32.mrf.mxu0
    %v464 = vadd.f32 0.0, %v463
    %465 = vmatmul.f32.gmra.mxu0 %v133
    %v466 = vpop.f32.mrf.mxu0
    %v467 = vadd.f32 0.0, %v466
    %468 = vmatmul.f32.gmra.mxu0 %v134
    %v469 = vpop.f32.mrf.mxu0
    %v470 = vadd.f32 0.0, %v469
    %471 = vmatmul.f32.gmra.mxu0 %v135
    %v472 = vpop.f32.mrf.mxu0
    %v473 = vadd.f32 0.0, %v472
    %474 = vmatmul.f32.gmra.mxu0 %v136
    %v475 = vpop.f32.mrf.mxu0
    %v476 = vadd.f32 0.0, %v475
    %477 = vmatmul.f32.gmra.mxu0 %v137
    %v478 = vpop.f32.mrf.mxu0
    %v479 = vadd.f32 0.0, %v478
    %480 = vmatmul.f32.gmra.mxu0 %v138
    %v481 = vpop.f32.mrf.mxu0
    %v482 = vadd.f32 0.0, %v481
    %483 = vmatmul.f32.gmra.mxu0 %v139
    %v484 = vpop.f32.mrf.mxu0
    %v485 = vadd.f32 0.0, %v484
    %486 = vmatmul.f32.gmra.mxu0 %v140
    %v487 = vpop.f32.mrf.mxu0
    %v488 = vadd.f32 0.0, %v487
    %489 = vmatmul.f32.gmra.mxu0 %v141
    %v490 = vpop.f32.mrf.mxu0
    %v491 = vadd.f32 0.0, %v490
    %492 = vmatmul.f32.gmra.mxu0 %v142
    %v493 = vpop.f32.mrf.mxu0
    %v494 = vadd.f32 0.0, %v493
    %495 = vmatmul.f32.gmra.mxu0 %v143
    %v496 = vpop.f32.mrf.mxu0
    %v497 = vadd.f32 0.0, %v496
    %498 = vmatmul.f32.gmra.mxu0 %v144
    %v499 = vpop.f32.mrf.mxu0
    %v500 = vadd.f32 0.0, %v499
    %501 = vmatmul.f32.gmra.mxu0 %v145
    %v502 = vpop.f32.mrf.mxu0
    %v503 = vadd.f32 0.0, %v502
    %504 = vmatmul.f32.gmra.mxu0 %v146
    %v505 = vpop.f32.mrf.mxu0
    %v506 = vadd.f32 0.0, %v505
    %507 = vmatmul.f32.gmra.mxu0 %v147
    %v508 = vpop.f32.mrf.mxu0
    %v509 = vadd.f32 0.0, %v508
    %510 = vmatmul.f32.gmra.mxu0 %v148
    %v511 = vpop.f32.mrf.mxu0
    %v512 = vadd.f32 0.0, %v511
    %513 = vmatmul.f32.gmra.mxu0 %v149
    %v514 = vpop.f32.mrf.mxu0
    %v515 = vadd.f32 0.0, %v514
    %516 = vmatmul.f32.gmra.mxu0 %v150
    %v517 = vpop.f32.mrf.mxu0
    %v518 = vadd.f32 0.0, %v517
    %519 = vmatmul.f32.gmra.mxu0 %v151
    %v520 = vpop.f32.mrf.mxu0
    %v521 = vadd.f32 0.0, %v520
    %522 = vmatmul.f32.gmra.mxu0 %v152
    %v523 = vpop.f32.mrf.mxu0
    %v524 = vadd.f32 0.0, %v523
    %525 = vmatmul.f32.gmra.mxu0 %v153
    %v526 = vpop.f32.mrf.mxu0
    %v527 = vadd.f32 0.0, %v526
    %528 = vmatmul.f32.gmra.mxu0 %v154
    %v529 = vpop.f32.mrf.mxu0
    %v530 = vadd.f32 0.0, %v529
    %531 = vmatmul.f32.gmra.mxu0 %v155
    %v532 = vpop.f32.mrf.mxu0
    %v533 = vadd.f32 0.0, %v532
    %534 = vmatmul.f32.gmra.mxu0 %v156
    %v535 = vpop.f32.mrf.mxu0
    %v536 = vadd.f32 0.0, %v535
    %537 = vmatmul.f32.gmra.mxu0 %v157
    %v538 = vpop.f32.mrf.mxu0
    %v539 = vadd.f32 0.0, %v538
    %540 = vmatmul.f32.gmra.mxu0 %v158
    %v541 = vpop.f32.mrf.mxu0
    %v542 = vadd.f32 0.0, %v541
    %543 = vmatmul.f32.gmra.mxu0 %v159
    %v544 = vpop.f32.mrf.mxu0
    %v545 = vadd.f32 0.0, %v544
    %546 = vmatmul.f32.gmra.mxu0 %v160
    %v547 = vpop.f32.mrf.mxu0
    %v548 = vadd.f32 0.0, %v547
    %549 = vmatmul.f32.gmra.mxu0 %v161
    %v550 = vpop.f32.mrf.mxu0
    %v551 = vadd.f32 0.0, %v550
    %552 = vmatmul.f32.gmra.mxu0 %v162
    %v553 = vpop.f32.mrf.mxu0
    %v554 = vadd.f32 0.0, %v553
    %555 = vmatmul.f32.gmra.mxu0 %v163
    %v556 = vpop.f32.mrf.mxu0
    %v557 = vadd.f32 0.0, %v556
    %558 = vmatmul.f32.gmra.mxu0 %v164
    %v559 = vpop.f32.mrf.mxu0
    %v560 = vadd.f32 0.0, %v559
    %561 = vmatmul.f32.gmra.mxu0 %v165
    %v562 = vpop.f32.mrf.mxu0
    %v563 = vadd.f32 0.0, %v562
    %564 = vmatmul.f32.gmra.mxu0 %v166
    %v565 = vpop.f32.mrf.mxu0
    %v566 = vadd.f32 0.0, %v565
    %567 = vmatmul.f32.gmra.mxu0 %v167
    %v568 = vpop.f32.mrf.mxu0
    %v569 = vadd.f32 0.0, %v568
    %570 = vmatmul.f32.gmra.mxu0 %v168
    %v571 = vpop.f32.mrf.mxu0
    %v572 = vadd.f32 0.0, %v571
    %573 = vmatmul.f32.gmra.mxu0 %v169
    %v574 = vpop.f32.mrf.mxu0
    %v575 = vadd.f32 0.0, %v574
    %576 = vmatmul.f32.gmra.mxu0 %v170
    %v577 = vpop.f32.mrf.mxu0
    %v578 = vadd.f32 0.0, %v577
    %579 = vmatmul.f32.gmra.mxu0 %v171
    %v580 = vpop.f32.mrf.mxu0
    %v581 = vadd.f32 0.0, %v580
    %582 = vmatmul.f32.gmra.mxu0 %v172
    %v583 = vpop.f32.mrf.mxu0
    %v584 = vadd.f32 0.0, %v583
    %585 = vmatmul.f32.gmra.mxu0 %v173
    %v586 = vpop.f32.mrf.mxu0
    %v587 = vadd.f32 0.0, %v586
    %588 = vmatmul.f32.gmra.mxu0 %v174
    %v589 = vpop.f32.mrf.mxu0
    %v590 = vadd.f32 0.0, %v589
    %591 = vdwg.mxu0
    %592 = vst [vmem:[#allocation7] sm:$0xff] %v209
    %593 = vst [vmem:[#allocation7 + $0x8] sm:$0xff] %v212
    %594 = vst [vmem:[#allocation7 + $0x10] sm:$0xff] %v215
    %595 = vst [vmem:[#allocation7 + $0x18] sm:$0xff] %v218
    %596 = vst [vmem:[#allocation7 + $0x20] sm:$0xff] %v221
    %597 = vst [vmem:[#allocation7 + $0x28] sm:$0xff] %v224
    %598 = vst [vmem:[#allocation7 + $0x30] sm:$0xff] %v227
    %599 = vst [vmem:[#allocation7 + $0x38] sm:$0xff] %v230
    %600 = vst [vmem:[#allocation7 + $0x40] sm:$0xff] %v233
    %601 = vst [vmem:[#allocation7 + $0x48] sm:$0xff] %v236
    %602 = vst [vmem:[#allocation7 + $0x50] sm:$0xff] %v239
    %603 = vst [vmem:[#allocation7 + $0x58] sm:$0xff] %v242
    %604 = vst [vmem:[#allocation7 + $0x60] sm:$0xff] %v245
    %605 = vst [vmem:[#allocation7 + $0x68] sm:$0xff] %v248
    %606 = vst [vmem:[#allocation7 + $0x70] sm:$0xff] %v251
    %607 = vst [vmem:[#allocation7 + $0x78] sm:$0xff] %v254
    %608 = vst [vmem:[#allocation7 + $0x80] sm:$0xff] %v257
    %609 = vst [vmem:[#allocation7 + $0x88] sm:$0xff] %v260
    %610 = vst [vmem:[#allocation7 + $0x90] sm:$0xff] %v263
    %611 = vst [vmem:[#allocation7 + $0x98] sm:$0xff] %v266
    %612 = vst [vmem:[#allocation7 + $0xa0] sm:$0xff] %v269
    %613 = vst [vmem:[#allocation7 + $0xa8] sm:$0xff] %v272
    %614 = vst [vmem:[#allocation7 + $0xb0] sm:$0xff] %v275
    %615 = vst [vmem:[#allocation7 + $0xb8] sm:$0xff] %v278
    %616 = vst [vmem:[#allocation7 + $0xc0] sm:$0xff] %v281
    %617 = vst [vmem:[#allocation7 + $0xc8] sm:$0xff] %v284
    %618 = vst [vmem:[#allocation7 + $0xd0] sm:$0xff] %v287
    %619 = vst [vmem:[#allocation7 + $0xd8] sm:$0xff] %v290
    %620 = vst [vmem:[#allocation7 + $0xe0] sm:$0xff] %v293
    %621 = vst [vmem:[#allocation7 + $0xe8] sm:$0xff] %v296
    %622 = vst [vmem:[#allocation7 + $0xf0] sm:$0xff] %v299
    %623 = vst [vmem:[#allocation7 + $0xf8] sm:$0xff] %v302
    %624 = vst [vmem:[#allocation7 + $0x100] sm:$0xff] %v305
    %625 = vst [vmem:[#allocation7 + $0x108] sm:$0xff] %v308
    %626 = vst [vmem:[#allocation7 + $0x110] sm:$0xff] %v311
    %627 = vst [vmem:[#allocation7 + $0x118] sm:$0xff] %v314
    %628 = vst [vmem:[#allocation7 + $0x120] sm:$0xff] %v317
    %629 = vst [vmem:[#allocation7 + $0x128] sm:$0xff] %v320
    %630 = vst [vmem:[#allocation7 + $0x130] sm:$0xff] %v323
    %631 = vst [vmem:[#allocation7 + $0x138] sm:$0xff] %v326
    %632 = vst [vmem:[#allocation7 + $0x140] sm:$0xff] %v329
    %633 = vst [vmem:[#allocation7 + $0x148] sm:$0xff] %v332
    %634 = vst [vmem:[#allocation7 + $0x150] sm:$0xff] %v335
    %635 = vst [vmem:[#allocation7 + $0x158] sm:$0xff] %v338
    %636 = vst [vmem:[#allocation7 + $0x160] sm:$0xff] %v341
    %637 = vst [vmem:[#allocation7 + $0x168] sm:$0xff] %v344
    %638 = vst [vmem:[#allocation7 + $0x170] sm:$0xff] %v347
    %639 = vst [vmem:[#allocation7 + $0x178] sm:$0xff] %v350
    %640 = vst [vmem:[#allocation7 + $0x180] sm:$0xff] %v353
    %641 = vst [vmem:[#allocation7 + $0x188] sm:$0xff] %v356
    %642 = vst [vmem:[#allocation7 + $0x190] sm:$0xff] %v359
    %643 = vst [vmem:[#allocation7 + $0x198] sm:$0xff] %v362
    %644 = vst [vmem:[#allocation7 + $0x1a0] sm:$0xff] %v365
    %645 = vst [vmem:[#allocation7 + $0x1a8] sm:$0xff] %v368
    %646 = vst [vmem:[#allocation7 + $0x1b0] sm:$0xff] %v371
    %647 = vst [vmem:[#allocation7 + $0x1b8] sm:$0xff] %v374
    %648 = vst [vmem:[#allocation7 + $0x1c0] sm:$0xff] %v377
    %649 = vst [vmem:[#allocation7 + $0x1c8] sm:$0xff] %v380
    %650 = vst [vmem:[#allocation7 + $0x1d0] sm:$0xff] %v383
    %651 = vst [vmem:[#allocation7 + $0x1d8] sm:$0xff] %v386
    %652 = vst [vmem:[#allocation7 + $0x1e0] sm:$0xff] %v389
    %653 = vst [vmem:[#allocation7 + $0x1e8] sm:$0xff] %v392
    %654 = vst [vmem:[#allocation7 + $0x1f0] sm:$0xff] %v395
    %655 = vst [vmem:[#allocation7 + $0x1f8] sm:$0xff] %v398
    %656 = vst [vmem:[#allocation7 + $0x200] sm:$0xff] %v401
    %657 = vst [vmem:[#allocation7 + $0x208] sm:$0xff] %v404
    %658 = vst [vmem:[#allocation7 + $0x210] sm:$0xff] %v407
    %659 = vst [vmem:[#allocation7 + $0x218] sm:$0xff] %v410
    %660 = vst [vmem:[#allocation7 + $0x220] sm:$0xff] %v413
    %661 = vst [vmem:[#allocation7 + $0x228] sm:$0xff] %v416
    %662 = vst [vmem:[#allocation7 + $0x230] sm:$0xff] %v419
    %663 = vst [vmem:[#allocation7 + $0x238] sm:$0xff] %v422
    %664 = vst [vmem:[#allocation7 + $0x240] sm:$0xff] %v425
    %665 = vst [vmem:[#allocation7 + $0x248] sm:$0xff] %v428
    %666 = vst [vmem:[#allocation7 + $0x250] sm:$0xff] %v431
    %667 = vst [vmem:[#allocation7 + $0x258] sm:$0xff] %v434
    %668 = vst [vmem:[#allocation7 + $0x260] sm:$0xff] %v437
    %669 = vst [vmem:[#allocation7 + $0x268] sm:$0xff] %v440
    %670 = vst [vmem:[#allocation7 + $0x270] sm:$0xff] %v443
    %671 = vst [vmem:[#allocation7 + $0x278] sm:$0xff] %v446
    %672 = vst [vmem:[#allocation7 + $0x280] sm:$0xff] %v449
    %673 = vst [vmem:[#allocation7 + $0x288] sm:$0xff] %v452
    %674 = vst [vmem:[#allocation7 + $0x290] sm:$0xff] %v455
    %675 = vst [vmem:[#allocation7 + $0x298] sm:$0xff] %v458
    %676 = vst [vmem:[#allocation7 + $0x2a0] sm:$0xff] %v461
    %677 = vst [vmem:[#allocation7 + $0x2a8] sm:$0xff] %v464
    %678 = vst [vmem:[#allocation7 + $0x2b0] sm:$0xff] %v467
    %679 = vst [vmem:[#allocation7 + $0x2b8] sm:$0xff] %v470
    %680 = vst [vmem:[#allocation7 + $0x2c0] sm:$0xff] %v473
    %681 = vst [vmem:[#allocation7 + $0x2c8] sm:$0xff] %v476
    %682 = vst [vmem:[#allocation7 + $0x2d0] sm:$0xff] %v479
    %683 = vst [vmem:[#allocation7 + $0x2d8] sm:$0xff] %v482
    %684 = vst [vmem:[#allocation7 + $0x2e0] sm:$0xff] %v485
    %685 = vst [vmem:[#allocation7 + $0x2e8] sm:$0xff] %v488
    %686 = vst [vmem:[#allocation7 + $0x2f0] sm:$0xff] %v491
    %687 = vst [vmem:[#allocation7 + $0x2f8] sm:$0xff] %v494
    %688 = vst [vmem:[#allocation7 + $0x300] sm:$0xff] %v497
    %689 = vst [vmem:[#allocation7 + $0x308] sm:$0xff] %v500
    %690 = vst [vmem:[#allocation7 + $0x310] sm:$0xff] %v503
    %691 = vst [vmem:[#allocation7 + $0x318] sm:$0xff] %v506
    %692 = vst [vmem:[#allocation7 + $0x320] sm:$0xff] %v509
    %693 = vst [vmem:[#allocation7 + $0x328] sm:$0xff] %v512
    %694 = vst [vmem:[#allocation7 + $0x330] sm:$0xff] %v515
    %695 = vst [vmem:[#allocation7 + $0x338] sm:$0xff] %v518
    %696 = vst [vmem:[#allocation7 + $0x340] sm:$0xff] %v521
    %697 = vst [vmem:[#allocation7 + $0x348] sm:$0xff] %v524
    %698 = vst [vmem:[#allocation7 + $0x350] sm:$0xff] %v527
    %699 = vst [vmem:[#allocation7 + $0x358] sm:$0xff] %v530
    %700 = vst [vmem:[#allocation7 + $0x360] sm:$0xff] %v533
    %701 = vst [vmem:[#allocation7 + $0x368] sm:$0xff] %v536
    %702 = vst [vmem:[#allocation7 + $0x370] sm:$0xff] %v539
    %703 = vst [vmem:[#allocation7 + $0x378] sm:$0xff] %v542
    %704 = vst [vmem:[#allocation7 + $0x380] sm:$0xff] %v545
    %705 = vst [vmem:[#allocation7 + $0x388] sm:$0xff] %v548
    %706 = vst [vmem:[#allocation7 + $0x390] sm:$0xff] %v551
    %707 = vst [vmem:[#allocation7 + $0x398] sm:$0xff] %v554
    %708 = vst [vmem:[#allocation7 + $0x3a0] sm:$0xff] %v557
    %709 = vst [vmem:[#allocation7 + $0x3a8] sm:$0xff] %v560
    %710 = vst [vmem:[#allocation7 + $0x3b0] sm:$0xff] %v563
    %711 = vst [vmem:[#allocation7 + $0x3b8] sm:$0xff] %v566
    %712 = vst [vmem:[#allocation7 + $0x3c0] sm:$0xff] %v569
    %713 = vst [vmem:[#allocation7 + $0x3c8] sm:$0xff] %v572
    %714 = vst [vmem:[#allocation7 + $0x3d0] sm:$0xff] %v575
    %715 = vst [vmem:[#allocation7 + $0x3d8] sm:$0xff] %v578
    %716 = vst [vmem:[#allocation7 + $0x3e0] sm:$0xff] %v581
    %717 = vst [vmem:[#allocation7 + $0x3e8] sm:$0xff] %v584
    %718 = vst [vmem:[#allocation7 + $0x3f0] sm:$0xff] %v587
    %719 = vst [vmem:[#allocation7 + $0x3f8] sm:$0xff] %v590
    %v720 = vadd.f32 %v209, %v212
    %v721 = vadd.f32 %v720, %v215
    %v722 = vadd.f32 %v721, %v218
    %v723 = vadd.f32 %v722, %v221
    %v724 = vadd.f32 %v723, %v224
    %v725 = vadd.f32 %v724, %v227
    %v726 = vadd.f32 %v725, %v230
    %v727 = vadd.f32 %v726, %v233
    %v728 = vadd.f32 %v727, %v236
    %v729 = vadd.f32 %v728, %v239
    %v730 = vadd.f32 %v729, %v242
    %v731 = vadd.f32 %v730, %v245
    %v732 = vadd.f32 %v731, %v248
    %v733 = vadd.f32 %v732, %v251
    %v734 = vadd.f32 %v733, %v254
    %v735 = vadd.f32 %v734, %v257
    %v736 = vadd.f32 %v735, %v260
    %v737 = vadd.f32 %v736, %v263
    %v738 = vadd.f32 %v737, %v266
    %v739 = vadd.f32 %v738, %v269
    %v740 = vadd.f32 %v739, %v272
    %v741 = vadd.f32 %v740, %v275
    %v742 = vadd.f32 %v741, %v278
    %v743 = vadd.f32 %v742, %v281
    %v744 = vadd.f32 %v743, %v284
    %v745 = vadd.f32 %v744, %v287
    %v746 = vadd.f32 %v745, %v290
    %v747 = vadd.f32 %v746, %v293
    %v748 = vadd.f32 %v747, %v296
    %v749 = vadd.f32 %v748, %v299
    %v750 = vadd.f32 %v749, %v302
    %v751 = vadd.f32 %v750, %v305
    %v752 = vadd.f32 %v751, %v308
    %v753 = vadd.f32 %v752, %v311
    %v754 = vadd.f32 %v753, %v314
    %v755 = vadd.f32 %v754, %v317
    %v756 = vadd.f32 %v755, %v320
    %v757 = vadd.f32 %v756, %v323
    %v758 = vadd.f32 %v757, %v326
    %v759 = vadd.f32 %v758, %v329
    %v760 = vadd.f32 %v759, %v332
    %v761 = vadd.f32 %v760, %v335
    %v762 = vadd.f32 %v761, %v338
    %v763 = vadd.f32 %v762, %v341
    %v764 = vadd.f32 %v763, %v344
    %v765 = vadd.f32 %v764, %v347
    %v766 = vadd.f32 %v765, %v350
    %v767 = vadd.f32 %v766, %v353
    %v768 = vadd.f32 %v767, %v356
    %v769 = vadd.f32 %v768, %v359
    %v770 = vadd.f32 %v769, %v362
    %v771 = vadd.f32 %v770, %v365
    %v772 = vadd.f32 %v771, %v368
    %v773 = vadd.f32 %v772, %v371
    %v774 = vadd.f32 %v773, %v374
    %v775 = vadd.f32 %v774, %v377
    %v776 = vadd.f32 %v775, %v380
    %v777 = vadd.f32 %v776, %v383
    %v778 = vadd.f32 %v777, %v386
    %v779 = vadd.f32 %v778, %v389
    %v780 = vadd.f32 %v779, %v392
    %v781 = vadd.f32 %v780, %v395
    %v782 = vadd.f32 %v781, %v398
    %v783 = vadd.f32 %v782, %v401
    %v784 = vadd.f32 %v783, %v404
    %v785 = vadd.f32 %v784, %v407
    %v786 = vadd.f32 %v785, %v410
    %v787 = vadd.f32 %v786, %v413
    %v788 = vadd.f32 %v787, %v416
    %v789 = vadd.f32 %v788, %v419
    %v790 = vadd.f32 %v789, %v422
    %v791 = vadd.f32 %v790, %v425
    %v792 = vadd.f32 %v791, %v428
    %v793 = vadd.f32 %v792, %v431
    %v794 = vadd.f32 %v793, %v434
    %v795 = vadd.f32 %v794, %v437
    %v796 = vadd.f32 %v795, %v440
    %v797 = vadd.f32 %v796, %v443
    %v798 = vadd.f32 %v797, %v446
    %v799 = vadd.f32 %v798, %v449
    %v800 = vadd.f32 %v799, %v452
    %v801 = vadd.f32 %v800, %v455
    %v802 = vadd.f32 %v801, %v458
    %v803 = vadd.f32 %v802, %v461
    %v804 = vadd.f32 %v803, %v464
    %v805 = vadd.f32 %v804, %v467
    %v806 = vadd.f32 %v805, %v470
    %v807 = vadd.f32 %v806, %v473
    %v808 = vadd.f32 %v807, %v476
    %v809 = vadd.f32 %v808, %v479
    %v810 = vadd.f32 %v809, %v482
    %v811 = vadd.f32 %v810, %v485
    %v812 = vadd.f32 %v811, %v488
    %v813 = vadd.f32 %v812, %v491
    %v814 = vadd.f32 %v813, %v494
    %v815 = vadd.f32 %v814, %v497
    %v816 = vadd.f32 %v815, %v500
    %v817 = vadd.f32 %v816, %v503
    %v818 = vadd.f32 %v817, %v506
    %v819 = vadd.f32 %v818, %v509
    %v820 = vadd.f32 %v819, %v512
    %v821 = vadd.f32 %v820, %v515
    %v822 = vadd.f32 %v821, %v518
    %v823 = vadd.f32 %v822, %v521
    %v824 = vadd.f32 %v823, %v524
    %v825 = vadd.f32 %v824, %v527
    %v826 = vadd.f32 %v825, %v530
    %v827 = vadd.f32 %v826, %v533
    %v828 = vadd.f32 %v827, %v536
    %v829 = vadd.f32 %v828, %v539
    %v830 = vadd.f32 %v829, %v542
    %v831 = vadd.f32 %v830, %v545
    %v832 = vadd.f32 %v831, %v548
    %v833 = vadd.f32 %v832, %v551
    %v834 = vadd.f32 %v833, %v554
    %v835 = vadd.f32 %v834, %v557
    %v836 = vadd.f32 %v835, %v560
    %v837 = vadd.f32 %v836, %v563
    %v838 = vadd.f32 %v837, %v566
    %v839 = vadd.f32 %v838, %v569
    %v840 = vadd.f32 %v839, %v572
    %v841 = vadd.f32 %v840, %v575
    %v842 = vadd.f32 %v841, %v578
    %v843 = vadd.f32 %v842, %v581
    %v844 = vadd.f32 %v843, %v584
    %v845 = vadd.f32 %v844, %v587
    %v846 = vadd.f32 %v845, %v590
    %v847 = vrot.slane %v846, 4
    %v848 = vadd.f32 %v846, %v847
    %v849 = vrot.slane %v848, 2
    %v850 = vadd.f32 %v848, %v849
    %v851 = vrot.slane %v850, 1
    %v852 = vadd.f32 %v850, %v851
    %853 = vst [vmem:[#allocation8] sm:$0x1] %v852
    %v854 = vmul.f32 %v209, %v209
    %v855 = vmul.f32 %v212, %v212
    %v856 = vmul.f32 %v215, %v215
    %v857 = vmul.f32 %v218, %v218
    %v858 = vmul.f32 %v221, %v221
    %v859 = vmul.f32 %v224, %v224
    %v860 = vmul.f32 %v227, %v227
    %v861 = vmul.f32 %v230, %v230
    %v862 = vmul.f32 %v233, %v233
    %v863 = vmul.f32 %v236, %v236
    %v864 = vmul.f32 %v239, %v239
    %v865 = vmul.f32 %v242, %v242
    %v866 = vmul.f32 %v245, %v245
    %v867 = vmul.f32 %v248, %v248
    %v868 = vmul.f32 %v251, %v251
    %v869 = vmul.f32 %v254, %v254
    %v870 = vmul.f32 %v257, %v257
    %v871 = vmul.f32 %v260, %v260
    %v872 = vmul.f32 %v263, %v263
    %v873 = vmul.f32 %v266, %v266
    %v874 = vmul.f32 %v269, %v269
    %v875 = vmul.f32 %v272, %v272
    %v876 = vmul.f32 %v275, %v275
    %v877 = vmul.f32 %v278, %v278
    %v878 = vmul.f32 %v281, %v281
    %v879 = vmul.f32 %v284, %v284
    %v880 = vmul.f32 %v287, %v287
    %v881 = vmul.f32 %v290, %v290
    %v882 = vmul.f32 %v293, %v293
    %v883 = vmul.f32 %v296, %v296
    %v884 = vmul.f32 %v299, %v299
    %v885 = vmul.f32 %v302, %v302
    %v886 = vmul.f32 %v305, %v305
    %v887 = vmul.f32 %v308, %v308
    %v888 = vmul.f32 %v311, %v311
    %v889 = vmul.f32 %v314, %v314
    %v890 = vmul.f32 %v317, %v317
    %v891 = vmul.f32 %v320, %v320
    %v892 = vmul.f32 %v323, %v323
    %v893 = vmul.f32 %v326, %v326
    %v894 = vmul.f32 %v329, %v329
    %v895 = vmul.f32 %v332, %v332
    %v896 = vmul.f32 %v335, %v335
    %v897 = vmul.f32 %v338, %v338
    %v898 = vmul.f32 %v341, %v341
    %v899 = vmul.f32 %v344, %v344
    %v900 = vmul.f32 %v347, %v347
    %v901 = vmul.f32 %v350, %v350
    %v902 = vmul.f32 %v353, %v353
    %v903 = vmul.f32 %v356, %v356
    %v904 = vmul.f32 %v359, %v359
    %v905 = vmul.f32 %v362, %v362
    %v906 = vmul.f32 %v365, %v365
    %v907 = vmul.f32 %v368, %v368
    %v908 = vmul.f32 %v371, %v371
    %v909 = vmul.f32 %v374, %v374
    %v910 = vmul.f32 %v377, %v377
    %v911 = vmul.f32 %v380, %v380
    %v912 = vmul.f32 %v383, %v383
    %v913 = vmul.f32 %v386, %v386
    %v914 = vmul.f32 %v389, %v389
    %v915 = vmul.f32 %v392, %v392
    %v916 = vmul.f32 %v395, %v395
    %v917 = vmul.f32 %v398, %v398
    %v918 = vmul.f32 %v401, %v401
    %v919 = vmul.f32 %v404, %v404
    %v920 = vmul.f32 %v407, %v407
    %v921 = vmul.f32 %v410, %v410
    %v922 = vmul.f32 %v413, %v413
    %v923 = vmul.f32 %v416, %v416
    %v924 = vmul.f32 %v419, %v419
    %v925 = vmul.f32 %v422, %v422
    %v926 = vmul.f32 %v425, %v425
    %v927 = vmul.f32 %v428, %v428
    %v928 = vmul.f32 %v431, %v431
    %v929 = vmul.f32 %v434, %v434
    %v930 = vmul.f32 %v437, %v437
    %v931 = vmul.f32 %v440, %v440
    %v932 = vmul.f32 %v443, %v443
    %v933 = vmul.f32 %v446, %v446
    %v934 = vmul.f32 %v449, %v449
    %v935 = vmul.f32 %v452, %v452
    %v936 = vmul.f32 %v455, %v455
    %v937 = vmul.f32 %v458, %v458
    %v938 = vmul.f32 %v461, %v461
    %v939 = vmul.f32 %v464, %v464
    %v940 = vmul.f32 %v467, %v467
    %v941 = vmul.f32 %v470, %v470
    %v942 = vmul.f32 %v473, %v473
    %v943 = vmul.f32 %v476, %v476
    %v944 = vmul.f32 %v479, %v479
    %v945 = vmul.f32 %v482, %v482
    %v946 = vmul.f32 %v485, %v485
    %v947 = vmul.f32 %v488, %v488
    %v948 = vmul.f32 %v491, %v491
    %v949 = vmul.f32 %v494, %v494
    %v950 = vmul.f32 %v497, %v497
    %v951 = vmul.f32 %v500, %v500
    %v952 = vmul.f32 %v503, %v503
    %v953 = vmul.f32 %v506, %v506
    %v954 = vmul.f32 %v509, %v509
    %v955 = vmul.f32 %v512, %v512
    %v956 = vmul.f32 %v515, %v515
    %v957 = vmul.f32 %v518, %v518
    %v958 = vmul.f32 %v521, %v521
    %v959 = vmul.f32 %v524, %v524
    %v960 = vmul.f32 %v527, %v527
    %v961 = vmul.f32 %v530, %v530
    %v962 = vmul.f32 %v533, %v533
    %v963 = vmul.f32 %v536, %v536
    %v964 = vmul.f32 %v539, %v539
    %v965 = vmul.f32 %v542, %v542
    %v966 = vmul.f32 %v545, %v545
    %v967 = vmul.f32 %v548, %v548
    %v968 = vmul.f32 %v551, %v551
    %v969 = vmul.f32 %v554, %v554
    %v970 = vmul.f32 %v557, %v557
    %v971 = vmul.f32 %v560, %v560
    %v972 = vmul.f32 %v563, %v563
    %v973 = vmul.f32 %v566, %v566
    %v974 = vmul.f32 %v569, %v569
    %v975 = vmul.f32 %v572, %v572
    %v976 = vmul.f32 %v575, %v575
    %v977 = vmul.f32 %v578, %v578
    %v978 = vmul.f32 %v581, %v581
    %v979 = vmul.f32 %v584, %v584
    %v980 = vmul.f32 %v587, %v587
    %v981 = vmul.f32 %v590, %v590
    %v982 = vadd.f32 %v854, %v855
    %v983 = vadd.f32 %v982, %v856
    %v984 = vadd.f32 %v983, %v857
    %v985 = vadd.f32 %v984, %v858
    %v986 = vadd.f32 %v985, %v859
    %v987 = vadd.f32 %v986, %v860
    %v988 = vadd.f32 %v987, %v861
    %v989 = vadd.f32 %v988, %v862
    %v990 = vadd.f32 %v989, %v863
    %v991 = vadd.f32 %v990, %v864
    %v992 = vadd.f32 %v991, %v865
    %v993 = vadd.f32 %v992, %v866
    %v994 = vadd.f32 %v993, %v867
    %v995 = vadd.f32 %v994, %v868
    %v996 = vadd.f32 %v995, %v869
    %v997 = vadd.f32 %v996, %v870
    %v998 = vadd.f32 %v997, %v871
    %v999 = vadd.f32 %v998, %v872
    %v1000 = vadd.f32 %v999, %v873
    %v1001 = vadd.f32 %v1000, %v874
    %v1002 = vadd.f32 %v1001, %v875
    %v1003 = vadd.f32 %v1002, %v876
    %v1004 = vadd.f32 %v1003, %v877
    %v1005 = vadd.f32 %v1004, %v878
    %v1006 = vadd.f32 %v1005, %v879
    %v1007 = vadd.f32 %v1006, %v880
    %v1008 = vadd.f32 %v1007, %v881
    %v1009 = vadd.f32 %v1008, %v882
    %v1010 = vadd.f32 %v1009, %v883
    %v1011 = vadd.f32 %v1010, %v884
    %v1012 = vadd.f32 %v1011, %v885
    %v1013 = vadd.f32 %v1012, %v886
    %v1014 = vadd.f32 %v1013, %v887
    %v1015 = vadd.f32 %v1014, %v888
    %v1016 = vadd.f32 %v1015, %v889
    %v1017 = vadd.f32 %v1016, %v890
    %v1018 = vadd.f32 %v1017, %v891
    %v1019 = vadd.f32 %v1018, %v892
    %v1020 = vadd.f32 %v1019, %v893
    %v1021 = vadd.f32 %v1020, %v894
    %v1022 = vadd.f32 %v1021, %v895
    %v1023 = vadd.f32 %v1022, %v896
    %v1024 = vadd.f32 %v1023, %v897
    %v1025 = vadd.f32 %v1024, %v898
    %v1026 = vadd.f32 %v1025, %v899
    %v1027 = vadd.f32 %v1026, %v900
    %v1028 = vadd.f32 %v1027, %v901
    %v1029 = vadd.f32 %v1028, %v902
    %v1030 = vadd.f32 %v1029, %v903
    %v1031 = vadd.f32 %v1030, %v904
    %v1032 = vadd.f32 %v1031, %v905
    %v1033 = vadd.f32 %v1032, %v906
    %v1034 = vadd.f32 %v1033, %v907
    %v1035 = vadd.f32 %v1034, %v908
    %v1036 = vadd.f32 %v1035, %v909
    %v1037 = vadd.f32 %v1036, %v910
    %v1038 = vadd.f32 %v1037, %v911
    %v1039 = vadd.f32 %v1038, %v912
    %v1040 = vadd.f32 %v1039, %v913
    %v1041 = vadd.f32 %v1040, %v914
    %v1042 = vadd.f32 %v1041, %v915
    %v1043 = vadd.f32 %v1042, %v916
    %v1044 = vadd.f32 %v1043, %v917
    %v1045 = vadd.f32 %v1044, %v918
    %v1046 = vadd.f32 %v1045, %v919
    %v1047 = vadd.f32 %v1046, %v920
    %v1048 = vadd.f32 %v1047, %v921
    %v1049 = vadd.f32 %v1048, %v922
    %v1050 = vadd.f32 %v1049, %v923
    %v1051 = vadd.f32 %v1050, %v924
    %v1052 = vadd.f32 %v1051, %v925
    %v1053 = vadd.f32 %v1052, %v926
    %v1054 = vadd.f32 %v1053, %v927
    %v1055 = vadd.f32 %v1054, %v928
    %v1056 = vadd.f32 %v1055, %v929
    %v1057 = vadd.f32 %v1056, %v930
    %v1058 = vadd.f32 %v1057, %v931
    %v1059 = vadd.f32 %v1058, %v932
    %v1060 = vadd.f32 %v1059, %v933
    %v1061 = vadd.f32 %v1060, %v934
    %v1062 = vadd.f32 %v1061, %v935
    %v1063 = vadd.f32 %v1062, %v936
    %v1064 = vadd.f32 %v1063, %v937
    %v1065 = vadd.f32 %v1064, %v938
    %v1066 = vadd.f32 %v1065, %v939
    %v1067 = vadd.f32 %v1066, %v940
    %v1068 = vadd.f32 %v1067, %v941
    %v1069 = vadd.f32 %v1068, %v942
    %v1070 = vadd.f32 %v1069, %v943
    %v1071 = vadd.f32 %v1070, %v944
    %v1072 = vadd.f32 %v1071, %v945
    %v1073 = vadd.f32 %v1072, %v946
    %v1074 = vadd.f32 %v1073, %v947
    %v1075 = vadd.f32 %v1074, %v948
    %v1076 = vadd.f32 %v1075, %v949
    %v1077 = vadd.f32 %v1076, %v950
    %v1078 = vadd.f32 %v1077, %v951
    %v1079 = vadd.f32 %v1078, %v952
    %v1080 = vadd.f32 %v1079, %v953
    %v1081 = vadd.f32 %v1080, %v954
    %v1082 = vadd.f32 %v1081, %v955
    %v1083 = vadd.f32 %v1082, %v956
    %v1084 = vadd.f32 %v1083, %v957
    %v1085 = vadd.f32 %v1084, %v958
    %v1086 = vadd.f32 %v1085, %v959
    %v1087 = vadd.f32 %v1086, %v960
    %v1088 = vadd.f32 %v1087, %v961
    %v1089 = vadd.f32 %v1088, %v962
    %v1090 = vadd.f32 %v1089, %v963
    %v1091 = vadd.f32 %v1090, %v964
    %v1092 = vadd.f32 %v1091, %v965
    %v1093 = vadd.f32 %v1092, %v966
    %v1094 = vadd.f32 %v1093, %v967
    %v1095 = vadd.f32 %v1094, %v968
    %v1096 = vadd.f32 %v1095, %v969
    %v1097 = vadd.f32 %v1096, %v970
    %v1098 = vadd.f32 %v1097, %v971
    %v1099 = vadd.f32 %v1098, %v972
    %v1100 = vadd.f32 %v1099, %v973
    %v1101 = vadd.f32 %v1100, %v974
    %v1102 = vadd.f32 %v1101, %v975
    %v1103 = vadd.f32 %v1102, %v976
    %v1104 = vadd.f32 %v1103, %v977
    %v1105 = vadd.f32 %v1104, %v978
    %v1106 = vadd.f32 %v1105, %v979
    %v1107 = vadd.f32 %v1106, %v980
    %v1108 = vadd.f32 %v1107, %v981
    %v1109 = vrot.slane %v1108, 4
    %v1110 = vadd.f32 %v1108, %v1109
    %v1111 = vrot.slane %v1110, 2
    %v1112 = vadd.f32 %v1110, %v1111
    %v1113 = vrot.slane %v1112, 1
    %v1114 = vadd.f32 %v1112, %v1113
    %1115 = vst [vmem:[#allocation8 + $0x1] sm:$0x1] %v1114
    // Predicated region
    $region18: #{tpu_custom_call.1} parent=1 // pred_check
      _
    $region19: #{tpu_custom_call.1} parent=1 // pred_check_branch
      %1117 = sbr.rel (0) target = $region21
    $region20: #{tpu_custom_call.1} parent=1 // pred_region
      %1119 = vsyncadd [#allocation4], 0
      %s1120 = sshll.u32 [#allocation7], 4
      %s1121 = int_to_ptr.vmem [resolvable:$true] %s1120
      %s1122 = sshll.u32 %s2, 4
      %s1123 = int_to_ptr.hbm [resolvable:$true] %s1122
      %1128 = dma.vmem_to_hbm [thread:$0]  %s1121, 16384, %s1123, [#allocation4], 128, 128, 8
    $region21: #{tpu_custom_call.1} parent=1 // pred_fallthru
      _
    // Predicated region
    $region22: #{tpu_custom_call.1} parent=1 // pred_check
      _
    $region23: #{tpu_custom_call.1} parent=1 // pred_check_branch
      %1130 = sbr.rel (0) target = $region25
    $region24: #{tpu_custom_call.1} parent=1 // pred_region
      %1132 = vsyncadd [#allocation9], 0
      %s1134 = sshll.u32 [#allocation8], 4
      %s1135 = int_to_ptr.vmem [resolvable:$true] %s1134
      %s1136 = sshll.u32 %s3, 4
      %s1137 = int_to_ptr.hbm [resolvable:$true] %s1136
      %1139 = dma.vmem_to_hbm [thread:$0]  %s1135, 32, %s1137, [#allocation9]
    $region25: #{tpu_custom_call.1} parent=1 // pred_fallthru
      _
    // Predicated region
    $region26: #{tpu_custom_call.1} parent=1 // pred_check
      _
    $region27: #{tpu_custom_call.1} parent=1 // pred_check_branch
      %1141 = sbr.rel (0) target = $region29
    $region28: #{tpu_custom_call.1} parent=1 // pred_region
      %1143 = dma.done [#allocation4], 16384
    $region29: #{tpu_custom_call.1} parent=1 // pred_fallthru
      _
    // Predicated region
    $region30: #{tpu_custom_call.1} parent=1 // pred_check
      _
    $region31: #{tpu_custom_call.1} parent=1 // pred_check_branch
      %1145 = sbr.rel (0) target = $region33
    $region32: #{tpu_custom_call.1} parent=1 // pred_region
      %1147 = dma.done [#allocation9], 32
    $region33: #{tpu_custom_call.1} parent=1 // pred_fallthru
      _
    %1148 = vsyncpa [#allocation3], 1
    %1149 = vsyncpa [#allocation6], 1
    %1150 = vsyncpa [#allocation4], 1
    %1151 = vsyncpa [#allocation9], 1

</llo_original>
